<compile_context>
chip_gen: v6e
topology: v6e:2x2x1
jax: 0.10.0
libtpu: 0.0.40
codegen_flags: <defaults>
</compile_context>

<pallas_src>
import numpy as np
import jax
import jax.numpy as jnp
from jax.experimental import pallas as pl
from jax.experimental.pallas import tpu as pltpu

FIELD_SIZE = 8
EMBED_SIZE = 4
DEEP_LAYERS = (32, 32)
FEATURE_SIZES = (7, 11, 13, 17, 19, 23, 29, 31)   # len == FIELD_SIZE
BATCH = 256


def _round_up(x, m):
    return -(-x // m) * m


FE = FIELD_SIZE * EMBED_SIZE                 # 32 embedding rows
K_IN = FE + FIELD_SIZE + 1                   # emb | first-order | const-1
K_PAD = _round_up(K_IN, 8)                   # 48  (padded contraction dim)
ROW_CONST = FE + FIELD_SIZE                  # 40  (constant-1 row of x)
DEEP_BLK = _round_up(DEEP_LAYERS[0] + 1, 8)  # 40  (layer-1 + ones lane + pad)
FM_BLK = _round_up(EMBED_SIZE, 8)            # 8   (field sums + pad)
LIN_BLK = 8                                  # 8   (1st-order sum + bias + pad)
N1 = DEEP_BLK + FM_BLK + LIN_BLK             # 56  (fused matmul output rows)


def _choose_tile_b(b):
    """Batch tile (multiple of 128).  Large tiles amortize per-step overhead,
    but keep >= 2 grid steps when possible so v7x's two TCs both get work."""
    b128 = _round_up(b, 128)
    if b128 <= 128:
        return 128
    half = b128 // 2
    return max(128, min(1024, (half // 128) * 128))


def deepfm_kernel(x_ref, r1t_ref, w2e_ref, out_ref):
    """All tensors carry batch on the LANE axis (minor dim)."""
    x = x_ref[...]                                                   # (K_PAD, TB) bf16

    # Fused MXU matmul: deep layer-1 preact (+b1) | ones lane | FM field sums |
    # first-order sum (+bias) — all from one RHS.
    z1 = jnp.dot(r1t_ref[...], x, preferred_element_type=jnp.float32)  # (N1, TB) f32

    # FM second order: 0.5 * ( sum_d (sum_f e_fd)^2 - sum_{f,d} e_fd^2 ).
    xe = x[:FE, :].astype(jnp.float32)
    sq_tot = jnp.sum(xe * xe, axis=0, keepdims=True)                 # XLU reduce (no 2nd matmul)
    se = z1[DEEP_BLK:DEEP_BLK + FM_BLK, :]                           # field sums (+ zero rows)
    fm2 = 0.5 * (jnp.sum(se * se, axis=0, keepdims=True) - sq_tot)   # (1, TB)

    # First-order sum + global bias (padding rows are zero).
    lin = jnp.sum(z1[DEEP_BLK + FM_BLK:N1, :], axis=0, keepdims=True)  # (1, TB)

    # Deep MLP.  b1 already folded into z1; the ones lane inside the relu block
    # carries b2 via the extra w2e column.
    h1e = jnp.maximum(z1[:DEEP_BLK, :], 0.0).astype(x.dtype)         # (DEEP_BLK, TB) bf16
    h2 = jnp.maximum(jnp.dot(w2e_ref[...], h1e,
                             preferred_element_type=jnp.float32), 0.0)  # (H2, TB)
    deep = jnp.sum(h2, axis=0, keepdims=True)                        # (1, TB)

    out_ref[...] = lin + fm2 + deep                                  # lane-dense store


def pack_params(params):
    """Precompute fused tables / RHS constants once (outside the hot path)."""
    F, E = FIELD_SIZE, EMBED_SIZE
    H1, H2 = DEEP_LAYERS
    f32 = jnp.float32

    # Fused embedding tables (one offset-indexed table per order).
    first_table = jnp.concatenate(params["first_emb"], axis=0)[:, 0]   # (sum(sizes),)
    second_table = jnp.concatenate(params["second_emb"], axis=0)       # (sum(sizes), E)
    offsets = jnp.asarray(
        np.concatenate([[0], np.cumsum(FEATURE_SIZES[:-1])]), jnp.int32)

    # Fused matmul-1 RHS, shape (K_PAD, N1).
    #   x rows:   [0,FE) scaled 2nd-order emb | [FE,FE+F) scaled 1st-order |
    #             ROW_CONST const-1 | zero pad
    #   z1 cols:  [0,H1) layer-1 preact (+b1) | H1 ones lane | pad |
    #             [DEEP_BLK, +E) field sums | pad | DEEP_BLK+FM_BLK lin sum (+bias) | pad
    r1 = np.zeros((K_PAD, N1), np.float32)
    r1[:FE, :H1] = np.asarray(params["w1"])
    r1[ROW_CONST, :H1] = np.asarray(params["b1"]).reshape(-1)
    r1[ROW_CONST, H1] = 1.0                                           # ones forwarder
    for f in range(F):
        for d in range(E):
            r1[f * E + d, DEEP_BLK + d] = 1.0                         # field-sum matrix
    r1[FE:FE + F, DEEP_BLK + FM_BLK] = 1.0                            # 1st-order sum
    r1[ROW_CONST, DEEP_BLK + FM_BLK] = float(np.asarray(params["bias"])[0])

    # Layer-2 weights with b2 folded in as an extra column: (H2, DEEP_BLK).
    w2e = np.zeros((H2, DEEP_BLK), np.float32)
    w2e[:, :H1] = np.asarray(params["w2"]).T
    w2e[:, H1] = np.asarray(params["b2"]).reshape(-1)

    return {"first_table": first_table, "second_table": second_table,
            "offsets": offsets,
            "r1t": jnp.asarray(r1.T, jnp.bfloat16),    # (N1, K_PAD) resident
            "w2e": jnp.asarray(w2e, jnp.bfloat16)}     # (H2, DEEP_BLK) resident


def deepfm_forward(packed, Xi, Xv):
    """Xi: (B, F, 1) int32, Xv: (B, F) f32  ->  (B,) f32 logits."""
    F = FIELD_SIZE
    H1, H2 = DEEP_LAYERS
    B = Xi.shape[0]
    f32 = jnp.float32

    idx = Xi[:, :, 0]                                              # (B, F)
    xv = Xv.astype(f32)

    # --- glue: fused embedding gathers (2 takes, Xv scaling folded in) ---
    flat_idx = idx + packed["offsets"][None, :]
    fm_first = jnp.take(packed["first_table"], flat_idx, axis=0) * xv            # (B, F)
    emb2 = jnp.take(packed["second_table"], flat_idx, axis=0) * xv[:, :, None]   # (B, F, E)
    x_cat = jnp.concatenate(
        [emb2.reshape(B, FE), fm_first, jnp.ones((B, 1), f32),
         jnp.zeros((B, K_PAD - K_IN), f32)], axis=1)                             # (B, K_PAD)

    tile_b = _choose_tile_b(B)
    grid_b = -(-B // tile_b)
    b_pad = grid_b * tile_b

    x_t = x_cat.T.astype(jnp.bfloat16)                             # (K_PAD, B) batch on lanes
    if b_pad != B:
        x_t = jnp.pad(x_t, ((0, 0), (0, b_pad - B)))

    cost = pl.CostEstimate(
        flops=2 * b_pad * (N1 * K_PAD + H2 * DEEP_BLK) + 8 * b_pad * K_PAD,
        transcendentals=0,
        bytes_accessed=2 * K_PAD * b_pad + 4 * b_pad
                       + 2 * (N1 * K_PAD + H2 * DEEP_BLK))

    out = pl.pallas_call(
        deepfm_kernel,
        out_shape=jax.ShapeDtypeStruct((1, b_pad), f32),
        grid=(grid_b,),
        in_specs=[
            pl.BlockSpec((K_PAD, tile_b), lambda i: (0, i)),   # activations (batch on lanes)
            pl.BlockSpec((N1, K_PAD), lambda i: (0, 0)),       # fused RHS-1 (resident)
            pl.BlockSpec((H2, DEEP_BLK), lambda i: (0, 0)),    # w2^T | b2 (resident)
        ],
        out_specs=pl.BlockSpec((1, tile_b), lambda i: (0, i)),
        compiler_params=pltpu.CompilerParams(
            dimension_semantics=("parallel",),
            allow_input_fusion=[True, False, False]),
        cost_estimate=cost,
    )(x_t, packed["r1t"], packed["w2e"])
    return out[0, :B]


def deepfm_reference(params, Xi, Xv):
    """Pure-JAX f32 reference mirroring the PyTorch forward (eval mode)."""
    B, F, _ = Xi.shape
    idx = Xi[:, :, 0]
    xv = Xv.astype(jnp.float32)
    first = [params["first_emb"][f][idx[:, f], 0] * xv[:, f] for f in range(F)]
    fm_first = jnp.stack(first, axis=1)                            # (B, F)
    second = [params["second_emb"][f][idx[:, f]] * xv[:, f:f + 1] for f in range(F)]
    sum_e = sum(second)
    sum_sq = sum(a * a for a in second)
    fm_second = 0.5 * (sum_e * sum_e - sum_sq)                     # (B, E)
    deep_emb = jnp.concatenate(second, axis=1)                     # (B, F*E)
    h1 = jax.nn.relu(deep_emb @ params["w1"] + params["b1"])
    h2 = jax.nn.relu(h1 @ params["w2"] + params["b2"])
    return (jnp.sum(fm_first, 1) + jnp.sum(fm_second, 1)
            + jnp.sum(h2, 1) + params["bias"][0])


def init_params(key):
    keys = jax.random.split(key, 4 + 2 * FIELD_SIZE)
    F, E = FIELD_SIZE, EMBED_SIZE
    H1, H2 = DEEP_LAYERS
    first_emb = [0.1 * jax.random.normal(keys[f], (FEATURE_SIZES[f], 1), jnp.float32)
                 for f in range(F)]
    second_emb = [0.1 * jax.random.normal(keys[F + f], (FEATURE_SIZES[f], E), jnp.float32)
                  for f in range(F)]
    w1 = 0.1 * jax.random.normal(keys[2 * F], (F * E, H1), jnp.float32)
    b1 = 0.1 * jax.random.normal(keys[2 * F + 1], (1, H1), jnp.float32)
    w2 = 0.1 * jax.random.normal(keys[2 * F + 2], (H1, H2), jnp.float32)
    b2 = 0.1 * jax.random.normal(keys[2 * F + 3], (1, H2), jnp.float32)
    bias = jnp.array([0.5], dtype=jnp.float32)
    return {"first_emb": first_emb, "second_emb": second_emb,
            "w1": w1, "b1": b1, "w2": w2, "b2": b2, "bias": bias}


if __name__ == "__main__":
    key = jax.random.PRNGKey(0)
    pkey, ikey, vkey = jax.random.split(key, 3)
    params = init_params(pkey)
    packed = pack_params(params)

    # Xi: per-field index within that field's vocabulary; Xv: feature values.
    ikeys = jax.random.split(ikey, FIELD_SIZE)
    Xi = jnp.stack(
        [jax.random.randint(ikeys[f], (BATCH,), 0, FEATURE_SIZES[f], dtype=jnp.int32)
         for f in range(FIELD_SIZE)], axis=1)[:, :, None]          # (B, F, 1)
    Xv = jax.random.uniform(vkey, (BATCH, FIELD_SIZE), jnp.float32, 0.5, 1.5)

    out = jax.block_until_ready(jax.jit(deepfm_forward)(packed, Xi, Xv))
    ref = jax.block_until_ready(deepfm_reference(params, Xi, Xv))

    # Tolerance covers bf16 activation/weight quantization + MXU f32-accumulation
    # rounding vs the pure-f32 XLA reference (outputs are O(1-4); measured error
    # is typically ~1e-3).
    if not np.allclose(np.asarray(out), np.asarray(ref), rtol=1e-2, atol=1e-2):
        diff = float(np.max(np.abs(np.asarray(out) - np.asarray(ref))))
        raise AssertionError(f"mismatch: max |diff| = {diff}")
    print("KERNEL_OK")
</pallas_src>

<mosaic_0001>
module attributes {stable_mosaic.version = 11 : i64} {
  func.func @deepfm_kernel(%arg0: i32, %arg1: memref<48x128xbf16, #tpu.memory_space<vmem>>, %arg2: memref<56x48xbf16, #tpu.memory_space<vmem>>, %arg3: memref<32x40xbf16, #tpu.memory_space<vmem>>, %arg4: memref<1x128xf32, #tpu.memory_space<vmem>>) attributes {dimension_semantics = [#tpu.dimension_semantics<parallel>], iteration_bounds = array<i64: 2>, scalar_prefetch = 0 : i64, scratch_operands = 0 : i64, tpu.core_type = #tpu.core_type<tc>, window_params = [{transform_indices = @transform_0, window_bounds = array<i64: 48, 128>}, {pipeline_mode = #tpu.pipeline_mode<synchronous>, transform_indices = @transform_1, window_bounds = array<i64: 56, 48>}, {pipeline_mode = #tpu.pipeline_mode<synchronous>, transform_indices = @transform_2, window_bounds = array<i64: 32, 40>}, {transform_indices = @transform_3, window_bounds = array<i64: 1, 128>}]} {
    %c0 = arith.constant 0 : index
    %c0_0 = arith.constant 0 : index
    %0 = vector.load %arg1[%c0, %c0_0] : memref<48x128xbf16, #tpu.memory_space<vmem>>, vector<48x128xbf16>
    %c0_1 = arith.constant 0 : index
    %c0_2 = arith.constant 0 : index
    %1 = vector.load %arg2[%c0_1, %c0_2] : memref<56x48xbf16, #tpu.memory_space<vmem>>, vector<56x48xbf16>
    %cst = arith.constant dense<0.000000e+00> : vector<56x128xf32>
    %2 = tpu.matmul %1, %0, %cst {dimension_numbers = #tpu.dot_dimension_numbers<[1], [0], [0], [1], [0, 0, 1, 1], [], []>} : vector<56x48xbf16>, vector<48x128xbf16>, vector<56x128xf32> -> vector<56x128xf32>
    %3 = vector.extract_strided_slice %0 {offsets = [0, 0], sizes = [32, 128], strides = [1, 1]} : vector<48x128xbf16> to vector<32x128xbf16>
    %4 = arith.extf %3 : vector<32x128xbf16> to vector<32x128xf32>
    %5 = arith.mulf %4, %4 : vector<32x128xf32>
    %cst_3 = arith.constant dense<0.000000e+00> : vector<128xf32>
    %6 = vector.multi_reduction <add>, %5, %cst_3 [0] : vector<32x128xf32> to vector<128xf32>
    %7 = vector.shape_cast %6 : vector<128xf32> to vector<1x128xf32>
    %8 = vector.extract_strided_slice %2 {offsets = [40, 0], sizes = [8, 128], strides = [1, 1]} : vector<56x128xf32> to vector<8x128xf32>
    %9 = arith.mulf %8, %8 : vector<8x128xf32>
    %cst_4 = arith.constant dense<0.000000e+00> : vector<128xf32>
    %10 = vector.multi_reduction <add>, %9, %cst_4 [0] : vector<8x128xf32> to vector<128xf32>
    %11 = vector.shape_cast %10 : vector<128xf32> to vector<1x128xf32>
    %12 = arith.subf %11, %7 : vector<1x128xf32>
    %cst_5 = arith.constant 5.000000e-01 : f32
    %13 = vector.broadcast %cst_5 : f32 to vector<1x128xf32>
    %14 = arith.mulf %13, %12 : vector<1x128xf32>
    %15 = vector.extract_strided_slice %2 {offsets = [48, 0], sizes = [8, 128], strides = [1, 1]} : vector<56x128xf32> to vector<8x128xf32>
    %cst_6 = arith.constant dense<0.000000e+00> : vector<128xf32>
    %16 = vector.multi_reduction <add>, %15, %cst_6 [0] : vector<8x128xf32> to vector<128xf32>
    %17 = vector.shape_cast %16 : vector<128xf32> to vector<1x128xf32>
    %18 = vector.extract_strided_slice %2 {offsets = [0, 0], sizes = [40, 128], strides = [1, 1]} : vector<56x128xf32> to vector<40x128xf32>
    %cst_7 = arith.constant 0.000000e+00 : f32
    %19 = vector.broadcast %cst_7 : f32 to vector<40x128xf32>
    %20 = arith.maximumf %18, %19 : vector<40x128xf32>
    %21 = arith.truncf %20 : vector<40x128xf32> to vector<40x128xbf16>
    %c0_8 = arith.constant 0 : index
    %c0_9 = arith.constant 0 : index
    %22 = vector.load %arg3[%c0_8, %c0_9] : memref<32x40xbf16, #tpu.memory_space<vmem>>, vector<32x40xbf16>
    %cst_10 = arith.constant dense<0.000000e+00> : vector<32x128xf32>
    %23 = tpu.matmul %22, %21, %cst_10 {dimension_numbers = #tpu.dot_dimension_numbers<[1], [0], [0], [1], [0, 0, 1, 1], [], []>} : vector<32x40xbf16>, vector<40x128xbf16>, vector<32x128xf32> -> vector<32x128xf32>
    %cst_11 = arith.constant 0.000000e+00 : f32
    %24 = vector.broadcast %cst_11 : f32 to vector<32x128xf32>
    %25 = arith.maximumf %23, %24 : vector<32x128xf32>
    %cst_12 = arith.constant dense<0.000000e+00> : vector<128xf32>
    %26 = vector.multi_reduction <add>, %25, %cst_12 [0] : vector<32x128xf32> to vector<128xf32>
    %27 = vector.shape_cast %26 : vector<128xf32> to vector<1x128xf32>
    %28 = arith.addf %17, %14 : vector<1x128xf32>
    %29 = arith.addf %28, %27 : vector<1x128xf32>
    %c0_13 = arith.constant 0 : index
    %c0_14 = arith.constant 0 : index
    %30 = vector.load %arg4[%c0_13, %c0_14] : memref<1x128xf32, #tpu.memory_space<vmem>>, vector<1x128xf32>
    tpu.vector_store %arg4[%c0_13, %c0_14], %29 {strides = array<i32>} : memref<1x128xf32, #tpu.memory_space<vmem>>, vector<1x128xf32>,
    return
  }
  func.func @transform_0(%arg0: i32) -> (i32, i32) {
    %c0_i32 = arith.constant 0 : i32
    %c0_i32_0 = arith.constant 0 : i32
    return %c0_i32, %arg0 : i32, i32
  }
  func.func @transform_1(%arg0: i32) -> (i32, i32) {
    %c0_i32 = arith.constant 0 : i32
    %c0_i32_0 = arith.constant 0 : i32
    %c0_i32_1 = arith.constant 0 : i32
    return %c0_i32, %c0_i32_0 : i32, i32
  }
  func.func @transform_2(%arg0: i32) -> (i32, i32) {
    %c0_i32 = arith.constant 0 : i32
    %c0_i32_0 = arith.constant 0 : i32
    %c0_i32_1 = arith.constant 0 : i32
    return %c0_i32, %c0_i32_0 : i32, i32
  }
  func.func @transform_3(%arg0: i32) -> (i32, i32) {
    %c0_i32 = arith.constant 0 : i32
    %c0_i32_0 = arith.constant 0 : i32
    return %c0_i32, %arg0 : i32, i32
  }
}

</mosaic_0001>

<llo_original>
// kernel: deepfm_forward.2
$region0: #{deepfm_forward.2}
  #allocation0 [shape = 'u32[]', space=smem, size = 0x4, offset = 0x4, fixed_abs, tag = 'smem constant byte address 0x4 - core index']
  #allocation1 [shape = 'u32[144,128]{1,0:T(1,128)}', space=vmem, size = 0x12000, scoped, tag = 'internal scratch']
  #allocation2 [shape = 'u32[2048]{0}', space=vmem, size = 0x2000, scoped, tag = 'scoped memory for deepfm_forward.2']
  #allocation3 [shape = 'u32[2048]{0}', space=vmem, size = 0x2000, scoped, tag = 'scoped memory for deepfm_forward.2']
  #allocation4 [shape = 'u32[2048]{0}', space=vmem, size = 0x2000, scoped, tag = 'scoped memory for deepfm_forward.2']
  #allocation5 [shape = 'u32[2048]{0}', space=vmem, size = 0x2000, scoped, tag = 'scoped memory for deepfm_forward.2']
  #allocation6 [shape = 'u32[2048]{0}', space=vmem, size = 0x2000, scoped, tag = 'scoped memory for deepfm_forward.2']
  #allocation7 [shape = 'u32[2048]{0}', space=vmem, size = 0x2000, scoped, tag = 'scoped memory for deepfm_forward.2']
  #allocation8 [shape = 'u32[2048]{0}', space=vmem, size = 0x2000, scoped, tag = 'scoped memory for deepfm_forward.2']
  #allocation9 [shape = 'u32[2048]{0}', space=vmem, size = 0x2000, scoped, tag = 'scoped memory for deepfm_forward.2']
  #allocation10 [shape = 'u32[2048]{0}', space=vmem, size = 0x2000, scoped, tag = 'scoped memory for deepfm_forward.2']
  #allocation11 [shape = 'u32[2048]{0}', space=vmem, size = 0x2000, scoped, tag = 'scoped memory for deepfm_forward.2']
  %s0 = inlined_call_operand.vmem [shape: bf16[56,48], index: 0, kind: input, shape index: {}]
  %s1 = inlined_call_operand.vmem [shape: bf16[32,40], index: 1, kind: input, shape index: {}]
  %s2 = inlined_call_operand.vmem [shape: bf16[256,8], index: 2, kind: input, shape index: {}]
  %s3 = inlined_call_operand.<no memory space> [shape: bf16[], index: 3, kind: input, shape index: {}]
  %s4 = inlined_call_operand.vmem [shape: bf16[256,32], index: 4, kind: input, shape index: {}]
  %s5 = inlined_call_operand.vmem [shape: bf16[48], index: 5, kind: input, shape index: {}]
  %s6 = inlined_call_operand.vmem [shape: bf16[48], index: 6, kind: input, shape index: {}]
  %s7 = inlined_call_operand.hbm [shape: f32[1,256], index: 7, kind: output, shape index: {}]
  %s8 = sld [smem:[#allocation0]]
  $region57: #{deepfm_forward.2} parent=0
    _
  %s10 = ssub.s32 1, %s8
  %s11 = scalar_select 0, %s10, %s8
  %v12 = vstv %s3
  %v13 = vunpack.i.l.bf16 %v12
  %v15 = vunpack.i.h.bf16 %v12
  %v17 = vstv %s3
  %v18 = vunpack.i.l.bf16 %v17
  %v20 = vunpack.i.h.bf16 %v17
  $region1: #{deepfm_forward.2} parent=0
    #allocation12 [shape = 'u8[1024]{0}', space=vmem, size = 0x400, scoped, tag = 'output window, operand 0']
    #allocation13 [shape = 's32[2]{0}', space=sflag, size = 0x8, scoped, tag = 'scoped memory for deepfm_forward.2']
    %22 = vsyncpa [#allocation13], 0
    %s23 = scalar_lea.sflag [#allocation13], 1
    %24 = vsyncpa %s23, 0
    loop: start=0, step=1, limit=4
    $region2: #{deepfm_forward.2} parent=1 // loop_pre_header
      _
    $region3: #{deepfm_forward.2} parent=1 // loop_header
      %s26 = sphi 0, %s30
      %p27 = scmp.ge.s32.totalorder %s26, 4
      %s40 = sphi 0, %s42
      %s43 = sphi 0, %s40
      %s44 = sphi 0, %s43
      %s60 = sphi 0, %s44
      %s66 = sphi 0, %s68
      %s69 = sphi 0, %s66
      %s70 = sphi 0, %s69
      %s86 = sphi 0, %s70
      %s90 = sphi 0, %s90
      %s92 = sphi 0, %s90
      %s93 = sphi 0, %s92
      %s107 = sphi 0, %s93
      %s111 = sphi 0, %s111
      %s113 = sphi 0, %s111
      %s114 = sphi 0, %s113
      %s128 = sphi 0, %s114
      %s132 = sphi 0, %s132
      %s134 = sphi 0, %s132
      %s135 = sphi 0, %s134
      %s149 = sphi 0, %s135
      %s153 = sphi 0, %s153
      %s155 = sphi 0, %s153
      %s156 = sphi 0, %s155
      %s170 = sphi 0, %s156
      %s176 = sphi 0, %s178
      %s179 = sphi 0, %s176
      %s180 = sphi 0, %s179
      %s196 = sphi 0, %s180
    $region4: #{deepfm_forward.2} parent=1 // loop_header_branch
      %29 = sbr.rel (%p27) target = $region8
    $region5: #{deepfm_forward.2} parent=1 // loop_body
      %s31 = ssub.s32 %s26, 1
      %s32 = ssub.s32 %s26, 2
      %s33 = sadd.s32 %s26, 1
      %s36 = ssub.s32 0, 0
      %s37 = ssub.s32 %s26, %s33
      %s38 = sor.u32 %s36, %s37
      %p39 = scmp.eq.s32.totalorder %s38, 0
      %s41 = sadd.s32 %s40, 1
      %s42 = scalar_select %p39, %s40, %s41
      %p45 = pneg %p39
      %p46 = scmp.eq.s32.totalorder %s26, 1
      %p47 = por %p45, %p46
      %p48 = scmp.ne.s32.totalorder %s40, %s43
      %p49 = scmp.eq.s32.totalorder %s26, 0
      %p50 = por %p48, %p49
      %p51 = scmp.ne.s32.totalorder %s40, %s43
      %p52 = scmp.eq.s32.totalorder %s31, 1
      %p53 = por %p51, %p52
      %p54 = scmp.ne.s32.totalorder %s43, %s44
      %p55 = scmp.eq.s32.totalorder %s31, 0
      %p56 = por %p54, %p55
      %p57 = scmp.ne.s32.totalorder %s43, %s44
      %p58 = scmp.eq.s32.totalorder %s32, 1
      %p59 = por %p57, %p58
      %p61 = scmp.ne.s32.totalorder %s44, %s60
      %p62 = scmp.eq.s32.totalorder %s32, 0
      %p63 = por %p61, %p62
      %s64 = ssub.s32 %s26, %s33
      %p65 = scmp.eq.s32.totalorder %s64, 0
      %s67 = sadd.s32 %s66, 1
      %s68 = scalar_select %p65, %s66, %s67
      %p71 = pneg %p65
      %p72 = scmp.eq.s32.totalorder %s26, 1
      %p73 = por %p71, %p72
      %p74 = scmp.ne.s32.totalorder %s66, %s69
      %p75 = scmp.eq.s32.totalorder %s26, 0
      %p76 = por %p74, %p75
      %p77 = scmp.ne.s32.totalorder %s66, %s69
      %p78 = scmp.eq.s32.totalorder %s31, 1
      %p79 = por %p77, %p78
      %p80 = scmp.ne.s32.totalorder %s69, %s70
      %p81 = scmp.eq.s32.totalorder %s31, 0
      %p82 = por %p80, %p81
      %p83 = scmp.ne.s32.totalorder %s69, %s70
      %p84 = scmp.eq.s32.totalorder %s32, 1
      %p85 = por %p83, %p84
      %p87 = scmp.ne.s32.totalorder %s70, %s86
      %p88 = scmp.eq.s32.totalorder %s32, 0
      %p89 = por %p87, %p88
      %s91 = sadd.s32 %s90, 1
      %p94 = scmp.eq.s32.totalorder %s26, 1
      %p95 = scmp.ne.s32.totalorder %s90, %s92
      %p96 = scmp.eq.s32.totalorder %s26, 0
      %p97 = por %p95, %p96
      %p98 = scmp.ne.s32.totalorder %s90, %s92
      %p99 = scmp.eq.s32.totalorder %s31, 1
      %p100 = por %p98, %p99
      %p101 = scmp.ne.s32.totalorder %s92, %s93
      %p102 = scmp.eq.s32.totalorder %s31, 0
      %p103 = por %p101, %p102
      %p104 = scmp.ne.s32.totalorder %s92, %s93
      %p105 = scmp.eq.s32.totalorder %s32, 1
      %p106 = por %p104, %p105
      %p108 = scmp.ne.s32.totalorder %s93, %s107
      %p109 = scmp.eq.s32.totalorder %s32, 0
      %p110 = por %p108, %p109
      %s112 = sadd.s32 %s111, 1
      %p115 = scmp.eq.s32.totalorder %s26, 1
      %p116 = scmp.ne.s32.totalorder %s111, %s113
      %p117 = scmp.eq.s32.totalorder %s26, 0
      %p118 = por %p116, %p117
      %p119 = scmp.ne.s32.totalorder %s111, %s113
      %p120 = scmp.eq.s32.totalorder %s31, 1
      %p121 = por %p119, %p120
      %p122 = scmp.ne.s32.totalorder %s113, %s114
      %p123 = scmp.eq.s32.totalorder %s31, 0
      %p124 = por %p122, %p123
      %p125 = scmp.ne.s32.totalorder %s113, %s114
      %p126 = scmp.eq.s32.totalorder %s32, 1
      %p127 = por %p125, %p126
      %p129 = scmp.ne.s32.totalorder %s114, %s128
      %p130 = scmp.eq.s32.totalorder %s32, 0
      %p131 = por %p129, %p130
      %s133 = sadd.s32 %s132, 1
      %p136 = scmp.eq.s32.totalorder %s26, 1
      %p137 = scmp.ne.s32.totalorder %s132, %s134
      %p138 = scmp.eq.s32.totalorder %s26, 0
      %p139 = por %p137, %p138
      %p140 = scmp.ne.s32.totalorder %s132, %s134
      %p141 = scmp.eq.s32.totalorder %s31, 1
      %p142 = por %p140, %p141
      %p143 = scmp.ne.s32.totalorder %s134, %s135
      %p144 = scmp.eq.s32.totalorder %s31, 0
      %p145 = por %p143, %p144
      %p146 = scmp.ne.s32.totalorder %s134, %s135
      %p147 = scmp.eq.s32.totalorder %s32, 1
      %p148 = por %p146, %p147
      %p150 = scmp.ne.s32.totalorder %s135, %s149
      %p151 = scmp.eq.s32.totalorder %s32, 0
      %p152 = por %p150, %p151
      %s154 = sadd.s32 %s153, 1
      %p157 = scmp.eq.s32.totalorder %s26, 1
      %p158 = scmp.ne.s32.totalorder %s153, %s155
      %p159 = scmp.eq.s32.totalorder %s26, 0
      %p160 = por %p158, %p159
      %p161 = scmp.ne.s32.totalorder %s153, %s155
      %p162 = scmp.eq.s32.totalorder %s31, 1
      %p163 = por %p161, %p162
      %p164 = scmp.ne.s32.totalorder %s155, %s156
      %p165 = scmp.eq.s32.totalorder %s31, 0
      %p166 = por %p164, %p165
      %p167 = scmp.ne.s32.totalorder %s155, %s156
      %p168 = scmp.eq.s32.totalorder %s32, 1
      %p169 = por %p167, %p168
      %p171 = scmp.ne.s32.totalorder %s156, %s170
      %p172 = scmp.eq.s32.totalorder %s32, 0
      %p173 = por %p171, %p172
      %s174 = ssub.s32 %s26, %s33
      %p175 = scmp.eq.s32.totalorder %s174, 0
      %s177 = sadd.s32 %s176, 1
      %s178 = scalar_select %p175, %s176, %s177
      %p181 = pneg %p175
      %p182 = scmp.eq.s32.totalorder %s26, 1
      %p183 = por %p181, %p182
      %p184 = scmp.ne.s32.totalorder %s176, %s179
      %p185 = scmp.eq.s32.totalorder %s26, 0
      %p186 = por %p184, %p185
      %p187 = scmp.ne.s32.totalorder %s176, %s179
      %p188 = scmp.eq.s32.totalorder %s31, 1
      %p189 = por %p187, %p188
      %p190 = scmp.ne.s32.totalorder %s179, %s180
      %p191 = scmp.eq.s32.totalorder %s31, 0
      %p192 = por %p190, %p191
      %p193 = scmp.ne.s32.totalorder %s179, %s180
      %p194 = scmp.eq.s32.totalorder %s32, 1
      %p195 = por %p193, %p194
      %p197 = scmp.ne.s32.totalorder %s180, %s196
      %p198 = scmp.eq.s32.totalorder %s32, 0
      %p199 = por %p197, %p198
      %p200 = scmp.le.s32.totalorder 1, %s26
      %p201 = scmp.lt.s32.totalorder %s26, 3
      %p202 = pnand %p200, %p201
      %p203 = pneg %p202
      // Predicated region
      $region9: #{deepfm_forward.2} parent=5 // pred_check
        _
      $region10: #{deepfm_forward.2} parent=5 // pred_check_branch
        %205 = sbr.rel (%p202) target = $region12
      $region11: #{deepfm_forward.2} parent=5 // pred_region
        %s206 = ssub.s32 %s26, 1
        // Predicated region
        $region13: #{deepfm_forward.2} parent=11 // pred_check
          %p207 = pneg %p145
        $region14: #{deepfm_forward.2} parent=11 // pred_check_branch
          %209 = sbr.rel (%p207) target = $region16
        $region15: #{deepfm_forward.2} parent=11 // pred_region
          _
        $region16: #{deepfm_forward.2} parent=11 // pred_fallthru
          _
        // Predicated region
        $region17: #{deepfm_forward.2} parent=11 // pred_check
          %p210 = pneg %p166
        $region18: #{deepfm_forward.2} parent=11 // pred_check_branch
          %212 = sbr.rel (%p210) target = $region20
        $region19: #{deepfm_forward.2} parent=11 // pred_region
          _
        $region20: #{deepfm_forward.2} parent=11 // pred_fallthru
          _
      $region12: #{deepfm_forward.2} parent=5 // pred_fallthru
        _
      %p213 = scmp.lt.s32.totalorder %s26, 2
      // Predicated region
      $region21: #{deepfm_forward.2} parent=5 // pred_check
        %p214 = pneg %p213
      $region22: #{deepfm_forward.2} parent=5 // pred_check_branch
        %216 = sbr.rel (%p214) target = $region24
      $region23: #{deepfm_forward.2} parent=5 // pred_region
        // Predicated region
        $region25: #{deepfm_forward.2} parent=23 // pred_check
          %p217 = pneg %p50
        $region26: #{deepfm_forward.2} parent=23 // pred_check_branch
          %219 = sbr.rel (%p217) target = $region28
        $region27: #{deepfm_forward.2} parent=23 // pred_region
          %s221 = ssub.s32 1, 0
          %s222 = smul.u32 64, %s221
          %p223 = scmp.lt.s32.totalorder 0, 0
          %s224 = scalar_select %p223, 0, 0
          %p225 = scmp.lt.s32.totalorder %s26, 1
          %s226 = scalar_select %p225, %s26, 1
          %s227 = smul.addr %s224, 2
          %s228 = sadd.s32 %s226, %s227
          %s229 = smul.addr %s228, 4
          %s230 = scalar_lea.vmem %s2, %s229
          %s232 = ssub.s32 1, 0
          %s233 = smul.u32 64, %s232
        $region28: #{deepfm_forward.2} parent=23 // pred_fallthru
          _
        // Predicated region
        $region29: #{deepfm_forward.2} parent=23 // pred_check
          %p234 = pneg %p76
        $region30: #{deepfm_forward.2} parent=23 // pred_check_branch
          %236 = sbr.rel (%p234) target = $region32
        $region31: #{deepfm_forward.2} parent=23 // pred_region
          %p237 = scmp.lt.s32.totalorder %s26, 1
          %s238 = scalar_select %p237, %s26, 1
          %s239 = smul.addr %s238, 4
          %s240 = scalar_lea.vmem %s4, %s239
        $region32: #{deepfm_forward.2} parent=23 // pred_fallthru
          _
        // Predicated region
        $region33: #{deepfm_forward.2} parent=23 // pred_check
          %p241 = pneg %p97
        $region34: #{deepfm_forward.2} parent=23 // pred_check_branch
          %243 = sbr.rel (%p241) target = $region36
        $region35: #{deepfm_forward.2} parent=23 // pred_region
          _
        $region36: #{deepfm_forward.2} parent=23 // pred_fallthru
          _
        // Predicated region
        $region37: #{deepfm_forward.2} parent=23 // pred_check
          %p244 = pneg %p118
        $region38: #{deepfm_forward.2} parent=23 // pred_check_branch
          %246 = sbr.rel (%p244) target = $region40
        $region39: #{deepfm_forward.2} parent=23 // pred_region
          _
        $region40: #{deepfm_forward.2} parent=23 // pred_fallthru
          _
      $region24: #{deepfm_forward.2} parent=5 // pred_fallthru
        _
      %p247 = scmp.le.s32.totalorder 1, %s26
      %p248 = scmp.lt.s32.totalorder %s26, 3
      %p249 = pnand %p247, %p248
      %p250 = pneg %p249
      // Predicated region
      $region41: #{deepfm_forward.2} parent=5 // pred_check
        _
      $region42: #{deepfm_forward.2} parent=5 // pred_check_branch
        %252 = sbr.rel (%p249) target = $region44
      $region43: #{deepfm_forward.2} parent=5 // pred_region
        #allocation14 [shape = 'u8[12288]{0}', space=vmem, size = 0x3000, dematerialized = true, scoped, tag = 'FusionAdapter Buffer %maximum_bitcast_fusion.1 = bf16[48,256]{1,0:T(8,128)(2,1)} fusion(%param_2.13, %param_3.12, %param_4.7, %param_5.4, %param_6.3), kind=kLoop, calls=%fused_computation.3.clone.clone, metadata={op_name="jit(deepfm_forward)/convert_element_type" stack_frame_id=19}']
        %s253 = ssub.s32 %s26, 1
        %s255 = ssub.s32 1, 0
        %s256 = smul.u32 64, %s255
        %p257 = scmp.lt.s32.totalorder 0, 0
        %s258 = scalar_select %p257, 0, 0
        %p259 = scmp.lt.s32.totalorder %s31, 1
        %s260 = scalar_select %p259, %s31, 1
        %s261 = smul.addr %s258, 2
        %s262 = sadd.s32 %s260, %s261
        %s263 = smul.addr %s262, 4
        %s264 = scalar_lea.vmem %s2, %s263
        %p265 = pneg %p56
        %p266 = pneg %p53
        %p267 = scmp.lt.s32.totalorder %s31, 1
        %s268 = scalar_select %p267, %s31, 1
        %s269 = smul.addr %s268, 4
        %s270 = scalar_lea.vmem %s4, %s269
        %p271 = pneg %p82
        %p272 = pneg %p79
        %p273 = pneg %p103
        %p274 = pneg %p100
        %p275 = pneg %p124
        %p276 = pneg %p121
        %p277 = pneg %p145
        %p278 = pneg %p142
        %p279 = pneg %p166
        %p280 = pneg %p163
        %p281 = pneg %p192
        %p282 = pneg %p189
        %s283 = sand.u32 %s179, 1
        %s284 = scalar_lea.sflag [#allocation13], %s283
        %s285 = sand.u32 %s179, 1
        %s286 = scalar_lea.vmem [#allocation12], %s285
        %s288 = ssub.s32 1, 0
        %s289 = smul.u32 64, %s288
        %p290 = scmp.lt.s32.totalorder 0, 0
        %s291 = scalar_select %p290, 0, 0
        %p292 = scmp.lt.s32.totalorder %s31, 1
        %s293 = scalar_select %p292, %s31, 1
        %s294 = smul.addr %s291, 2
        %s295 = sadd.s32 %s293, %s294
        %s296 = smul.addr %s295, 4
        %s297 = scalar_lea.vmem %s2, %s296
        %s299 = ssub.s32 1, 0
        %s300 = smul.u32 64, %s299
        %p301 = scmp.lt.s32.totalorder %s31, 1
        %s302 = scalar_select %p301, %s31, 1
        %s303 = smul.addr %s302, 4
        %s304 = scalar_lea.vmem %s4, %s303
        %s305 = smul.addr %s31, 128
        %s306 = smul.addr %s31, 128
        %s307 = ssub.s32 0, 0
        %p308 = scmp.lt.s32.totalorder %s307, 0
        %s309 = scalar_select %p308, 0, 255
        %s310 = sshrl.u32 %s309, 1
        %s311 = sor.u32 %s309, %s310
        %s312 = sand.u32 %s311, 85
        %s313 = sshrl.u32 %s312, 1
        %s314 = sor.u32 %s312, %s313
        %s315 = sand.u32 51, %s314
        %s316 = sshrl.u32 %s315, 2
        %s317 = sor.u32 %s315, %s316
        %s318 = sand.u32 15, %s317
        %v319 = vld [vmem:[%s297] sm:%s318]
        %v320 = vunpack.c.l.bf16 %v319
        %v321 = vunpack.c.h.bf16 %v319
        %v322 = vld [vmem:[%s304] sm:$0xf]
        %v323 = vunpack.c.l.bf16 %v322
        %v324 = vunpack.c.h.bf16 %v322
        %v325 = vld [vmem:[%s5] ss:$0 sm:$0xff]
        %v326 = vunpack.i.l.bf16 %v325
        %v328 = vunpack.i.h.bf16 %v325
        %331 = vbcast.lane.b32.xlu0 %v326, 256
        %v332 = vpop.permute.xlu0 %331
        %v333 = vld [vmem:[%s6] ss:$0 sm:$0xff]
        %v334 = vunpack.i.l.bf16 %v333
        %v336 = vunpack.i.h.bf16 %v333
        %339 = vbcast.lane.b32.xlu0 %v334, 256
        %v340 = vpop.permute.xlu0 %339
        %341 = xla_tuple %v323, %v13
        %342 = xla_tuple %341
        %v343 = vmax.f32 %v323, %v13
        %344 = xla_tuple %v343
        %345 = xla_tuple %v343, %v340
        %346 = xla_tuple %345
        %v347 = vmax.f32 %v343, %v340
        %348 = xla_tuple %v347
        %349 = xla_tuple %v347, %v332
        %350 = xla_tuple %349
        %v351 = vmax.f32 %v347, %v332
        %352 = xla_tuple %v351
        %v353 = vpack.c.bf16 0.0, %v351
        %s355 = ssub.s32 16, 1
        %356 = vst [vmem:[#allocation14] sm:%s355] %v353
        %s357 = scalar_lea.vmem %s304, 8
        %v358 = vld [vmem:[%s357] sm:$0xf]
        %v359 = vunpack.c.l.bf16 %v358
        %v360 = vunpack.c.h.bf16 %v358
        %v361 = vld [vmem:[%s5] ss:$0 sm:$0xff]
        %v362 = vunpack.i.l.bf16 %v361
        %v364 = vunpack.i.h.bf16 %v361
        %s367 = sor.u32 256, 8
        %368 = vbcast.lane.b32.xlu0 %v362, %s367
        %v369 = vpop.permute.xlu0 %368
        %v370 = vld [vmem:[%s6] ss:$0 sm:$0xff]
        %v371 = vunpack.i.l.bf16 %v370
        %v373 = vunpack.i.h.bf16 %v370
        %s376 = sor.u32 256, 8
        %377 = vbcast.lane.b32.xlu0 %v371, %s376
        %v378 = vpop.permute.xlu0 %377
        %379 = xla_tuple %v359, %v13
        %380 = xla_tuple %379
        %v381 = vmax.f32 %v359, %v13
        %382 = xla_tuple %v381
        %383 = xla_tuple %v381, %v378
        %384 = xla_tuple %383
        %v385 = vmax.f32 %v381, %v378
        %386 = xla_tuple %v385
        %387 = xla_tuple %v385, %v369
        %388 = xla_tuple %387
        %v389 = vmax.f32 %v385, %v369
        %390 = xla_tuple %v389
        %s391 = scalar_lea.vmem [#allocation14], 4
        %v392 = vpack.c.bf16 0.0, %v389
        %s394 = ssub.s32 16, 1
        %395 = vst [vmem:[%s391] sm:%s394] %v392
        %s396 = scalar_lea.vmem %s304, 16
        %s398 = sor.u32 255, 127
        %s399 = sand.u32 %s398, 85
        %s400 = sshrl.u32 %s399, 1
        %s401 = sor.u32 %s399, %s400
        %s402 = sand.u32 51, %s401
        %s403 = sshrl.u32 %s402, 2
        %s404 = sor.u32 %s402, %s403
        %s405 = sand.u32 15, %s404
        %v406 = vld [vmem:[%s396] sm:%s405]
        %v407 = vunpack.c.l.bf16 %v406
        %v408 = vunpack.c.h.bf16 %v406
        %v409 = vld [vmem:[%s5] ss:$0 sm:$0xff]
        %v410 = vunpack.i.l.bf16 %v409
        %v412 = vunpack.i.h.bf16 %v409
        %s415 = sor.u32 256, 16
        %416 = vbcast.lane.b32.xlu0 %v410, %s415
        %v417 = vpop.permute.xlu0 %416
        %v418 = vld [vmem:[%s6] ss:$0 sm:$0xff]
        %v419 = vunpack.i.l.bf16 %v418
        %v421 = vunpack.i.h.bf16 %v418
        %s424 = sor.u32 256, 16
        %425 = vbcast.lane.b32.xlu0 %v419, %s424
        %v426 = vpop.permute.xlu0 %425
        %427 = xla_tuple %v407, %v13
        %428 = xla_tuple %427
        %v429 = vmax.f32 %v407, %v13
        %430 = xla_tuple %v429
        %431 = xla_tuple %v429, %v426
        %432 = xla_tuple %431
        %v433 = vmax.f32 %v429, %v426
        %434 = xla_tuple %v433
        %435 = xla_tuple %v433, %v417
        %436 = xla_tuple %435
        %v437 = vmax.f32 %v433, %v417
        %438 = xla_tuple %v437
        %s439 = scalar_lea.vmem [#allocation14], 8
        %v440 = vpack.c.bf16 0.0, %v437
        %s442 = ssub.s32 16, 1
        %443 = vst [vmem:[%s439] sm:%s442] %v440
        %s444 = scalar_lea.vmem %s304, 24
        %s446 = sor.u32 255, 127
        %s447 = sand.u32 %s446, 85
        %s448 = sshrl.u32 %s447, 1
        %s449 = sor.u32 %s447, %s448
        %s450 = sand.u32 51, %s449
        %s451 = sshrl.u32 %s450, 2
        %s452 = sor.u32 %s450, %s451
        %s453 = sand.u32 15, %s452
        %v454 = vld [vmem:[%s444] sm:%s453]
        %v455 = vunpack.c.l.bf16 %v454
        %v456 = vunpack.c.h.bf16 %v454
        %v457 = vld [vmem:[%s5] ss:$0 sm:$0xff]
        %v458 = vunpack.i.l.bf16 %v457
        %v460 = vunpack.i.h.bf16 %v457
        %s463 = sor.u32 256, 24
        %464 = vbcast.lane.b32.xlu0 %v458, %s463
        %v465 = vpop.permute.xlu0 %464
        %v466 = vld [vmem:[%s6] ss:$0 sm:$0xff]
        %v467 = vunpack.i.l.bf16 %v466
        %v469 = vunpack.i.h.bf16 %v466
        %s472 = sor.u32 256, 24
        %473 = vbcast.lane.b32.xlu0 %v467, %s472
        %v474 = vpop.permute.xlu0 %473
        %475 = xla_tuple %v455, %v13
        %476 = xla_tuple %475
        %v477 = vmax.f32 %v455, %v13
        %478 = xla_tuple %v477
        %479 = xla_tuple %v477, %v474
        %480 = xla_tuple %479
        %v481 = vmax.f32 %v477, %v474
        %482 = xla_tuple %v481
        %483 = xla_tuple %v481, %v465
        %484 = xla_tuple %483
        %v485 = vmax.f32 %v481, %v465
        %486 = xla_tuple %v485
        %s487 = scalar_lea.vmem [#allocation14], 12
        %v488 = vpack.c.bf16 0.0, %v485
        %s490 = ssub.s32 16, 1
        %491 = vst [vmem:[%s487] sm:%s490] %v488
        %v492 = vld [vmem:[%s5] ss:$0 sm:$0xff]
        %v493 = vunpack.i.l.bf16 %v492
        %v495 = vunpack.i.h.bf16 %v492
        %s498 = sor.u32 256, 32
        %499 = vbcast.lane.b32.xlu0 %v493, %s498
        %v500 = vpop.permute.xlu0 %499
        %v501 = vld [vmem:[%s6] ss:$0 sm:$0xff]
        %v502 = vunpack.i.l.bf16 %v501
        %v504 = vunpack.i.h.bf16 %v501
        %s507 = sor.u32 256, 32
        %508 = vbcast.lane.b32.xlu0 %v502, %s507
        %v509 = vpop.permute.xlu0 %508
        %510 = xla_tuple %v18, %v320
        %511 = xla_tuple %510
        %v512 = vmax.f32 %v18, %v320
        %513 = xla_tuple %v512
        %514 = xla_tuple %v512, %v509
        %515 = xla_tuple %514
        %v516 = vmax.f32 %v512, %v509
        %517 = xla_tuple %v516
        %518 = xla_tuple %v516, %v500
        %519 = xla_tuple %518
        %v520 = vmax.f32 %v516, %v500
        %521 = xla_tuple %v520
        %s522 = scalar_lea.vmem [#allocation14], 16
        %v523 = vpack.c.bf16 0.0, %v520
        %s525 = ssub.s32 16, 1
        %526 = vst [vmem:[%s522] sm:%s525] %v523
        %v527 = vld [vmem:[%s5] ss:$0 sm:$0xff]
        %v528 = vunpack.i.l.bf16 %v527
        %v530 = vunpack.i.h.bf16 %v527
        %s533 = sor.u32 256, 40
        %534 = vbcast.lane.b32.xlu0 %v528, %s533
        %v535 = vpop.permute.xlu0 %534
        %v536 = vld [vmem:[%s6] ss:$0 sm:$0xff]
        %v537 = vunpack.i.l.bf16 %v536
        %v539 = vunpack.i.h.bf16 %v536
        %s542 = sor.u32 256, 40
        %543 = vbcast.lane.b32.xlu0 %v537, %s542
        %v544 = vpop.permute.xlu0 %543
        %545 = xla_tuple %v18, %v13
        %546 = xla_tuple %545
        %v547 = vmax.f32 %v18, %v13
        %548 = xla_tuple %v547
        %549 = xla_tuple %v547, %v544
        %550 = xla_tuple %549
        %v551 = vmax.f32 %v547, %v544
        %552 = xla_tuple %v551
        %553 = xla_tuple %v551, %v535
        %554 = xla_tuple %553
        %v555 = vmax.f32 %v551, %v535
        %556 = xla_tuple %v555
        %s557 = scalar_lea.vmem [#allocation14], 20
        %v558 = vpack.c.bf16 0.0, %v555
        %s560 = ssub.s32 16, 1
        %561 = vst [vmem:[%s557] sm:%s560] %v558
        %v563 = vld [vmem:[#allocation14] sm:$0xf]
        %v564 = vld [vmem:[#allocation14 + $0x4] sm:$0xf]
        %v565 = vld [vmem:[#allocation14 + $0x8] sm:$0xf]
        %v566 = vld [vmem:[#allocation14 + $0xc] sm:$0xf]
        %v567 = vld [vmem:[#allocation14 + $0x10] sm:$0xf]
        %v568 = vld [vmem:[#allocation14 + $0x14] sm:$0xf]
        %v569 = vld [vmem:[%s0] sm:$0xf]
        %v570 = vld [vmem:[%s0 + $0x4] sm:$0xf]
        %v571 = vld [vmem:[%s0 + $0x8] sm:$0xf]
        %v572 = vld [vmem:[%s0 + $0xc] sm:$0xf]
        %v573 = vld [vmem:[%s0 + $0x10] sm:$0xf]
        %v574 = vld [vmem:[%s0 + $0x14] sm:$0xf]
        %v575 = vld [vmem:[%s0 + $0x18] sm:$0xf]
        %v583 = vunpack.c.l.b16 %v569
        %v584 = vunpack.c.l.b16 %v570
        %v585 = vunpack.c.l.b16 %v571
        %v586 = vunpack.c.l.b16 %v572
        %v587 = vunpack.c.l.b16 %v573
        %v588 = vunpack.c.l.b16 %v574
        %v589 = vunpack.c.l.b16 %v575
        %v590 = vpack.c.b16 %v584, %v583
        %v591 = vpack.c.b16 %v586, %v585
        %v592 = vpack.c.b16 %v588, %v587
        %v593 = vpack.c.b16 %v589, %v589
        %v600 = vunpack.c.l.b16 %v563
        %v601 = vunpack.c.l.b16 %v564
        %v602 = vunpack.c.l.b16 %v565
        %v603 = vunpack.c.l.b16 %v566
        %v604 = vunpack.c.l.b16 %v567
        %v605 = vunpack.c.l.b16 %v568
        %v606 = vpack.c.b16 %v601, %v600
        %v607 = vpack.c.b16 %v603, %v602
        %v608 = vpack.c.b16 %v605, %v604
        %vm612 = vcmask 392192
        %v614 = vsel %vm612, %v590, 0
        %v617 = vsel %vm612, %v591, 0
        %v620 = vsel %vm612, %v592, 0
        %v623 = vsel %vm612, %v593, 0
        %625 = vmatprep.subr.bf16.mxu0 0
        %626 = vmatpush1.bf16.msra.mxu0 0
        %627 = vmatprep.subr.bf16.mxu0 0
        %628 = vmatpush1.bf16.msra.mxu0 0
        %629 = vmatprep.subr.bf16.mxu0 0
        %630 = vmatpush1.bf16.msra.mxu0 0
        %631 = vmatprep.subr.bf16.mxu0 0
        %632 = vmatpush1.bf16.msra.mxu0 0
        %633 = vmatprep.subr.bf16.mxu0 0
        %634 = vmatpush1.bf16.msra.mxu0 0
        %635 = vmatprep.subr.bf16.mxu0 0
        %636 = vmatpush1.bf16.msra.mxu0 %v608
        %637 = vmatprep.subr.bf16.mxu0 0
        %638 = vmatpush1.bf16.msra.mxu0 %v607
        %639 = vmatprep.subr.bf16.mxu0 0
        %640 = vmatpush1.bf16.msra.mxu0 %v606
        %641 = vmatprep.subr.bf16.mxu0 0
        %642 = vmatpush2.bf16.msra.mxu0 0
        %643 = vmatprep.subr.bf16.mxu0 0
        %644 = vmatpush2.bf16.msra.mxu0 0
        %645 = vmatprep.subr.bf16.mxu0 0
        %646 = vmatpush2.bf16.msra.mxu0 0
        %647 = vmatprep.subr.bf16.mxu0 0
        %648 = vmatpush2.bf16.msra.mxu0 0
        %649 = vmatprep.subr.bf16.mxu0 0
        %650 = vmatpush2.bf16.msra.mxu0 0
        %651 = vmatprep.subr.bf16.mxu0 0
        %652 = vmatpush2.bf16.msra.mxu0 0
        %653 = vmatprep.subr.bf16.mxu0 0
        %654 = vmatpush2.bf16.msra.mxu0 0
        %655 = vmatprep.subr.bf16.mxu0 0
        %656 = vmatpush2.bf16.msra.mxu0 0
        %657 = vmatprep.mubr.bf16.mxu0 0
        %658 = vmatmul.mubr.bf16.gmra.mxu0 %v614
        %v659 = vpop.f32.mrf.mxu0
        %v660 = vadd.f32 0.0, %v659
        %v661 = vpop.f32.mrf.mxu0
        %v662 = vpop.f32.mrf.mxu0
        %v663 = vadd.f32 0.0, %v662
        %v664 = vpop.f32.mrf.mxu0
        %665 = vmatprep.mubr.bf16.mxu0 0
        %666 = vmatmul.mubr.bf16.gmra.mxu0 %v617
        %v667 = vpop.f32.mrf.mxu0
        %v668 = vadd.f32 0.0, %v667
        %v669 = vpop.f32.mrf.mxu0
        %v670 = vpop.f32.mrf.mxu0
        %v671 = vadd.f32 0.0, %v670
        %v672 = vpop.f32.mrf.mxu0
        %673 = vmatprep.mubr.bf16.mxu0 0
        %674 = vmatmul.mubr.bf16.gmra.mxu0 %v620
        %v675 = vpop.f32.mrf.mxu0
        %v676 = vadd.f32 0.0, %v675
        %v677 = vpop.f32.mrf.mxu0
        %v678 = vpop.f32.mrf.mxu0
        %v679 = vadd.f32 0.0, %v678
        %v680 = vpop.f32.mrf.mxu0
        %681 = vmatprep.mubr.bf16.mxu0 0
        %682 = vmatmul.mubr.bf16.gmra.mxu0 %v623
        %v683 = vpop.f32.mrf.mxu0
        %v684 = vadd.f32 0.0, %v683
        %v685 = vpop.f32.mrf.mxu0
        %v686 = vpop.f32.mrf.mxu0
        %v687 = vpop.f32.mrf.mxu0
        %688 = vdwg.mxu0
        %v689 = vunpack.c.l.bf16 %v563
        %v690 = vunpack.c.l.bf16 %v564
        %v691 = vunpack.c.l.bf16 %v565
        %v692 = vunpack.c.l.bf16 %v566
        %v693 = vmul.f32 %v689, %v689
        %v694 = vmul.f32 %v690, %v690
        %v695 = vmul.f32 %v691, %v691
        %v696 = vmul.f32 %v692, %v692
        %v697 = vadd.f32 %v693, %v694
        %v698 = vadd.f32 %v697, %v695
        %v699 = vadd.f32 %v698, %v696
        %v700 = vrot.slane %v699, 4
        %v701 = vadd.f32 %v699, %v700
        %v702 = vrot.slane %v701, 2
        %v703 = vadd.f32 %v701, %v702
        %v704 = vrot.slane %v703, 1
        %v705 = vadd.f32 %v703, %v704
        %v706 = vmul.f32 %v679, %v679
        %v707 = vrot.slane %v706, 4
        %v708 = vadd.f32 %v706, %v707
        %v709 = vrot.slane %v708, 2
        %v710 = vadd.f32 %v708, %v709
        %v711 = vrot.slane %v710, 1
        %v712 = vadd.f32 %v710, %v711
        %v713 = vsub.f32 %v712, %v705
        %v714 = vmul.f32 %v713, 0.5
        %v715 = vrot.slane %v684, 4
        %v716 = vadd.f32 %v684, %v715
        %v717 = vrot.slane %v716, 2
        %v718 = vadd.f32 %v716, %v717
        %v719 = vrot.slane %v718, 1
        %v720 = vadd.f32 %v718, %v719
        %v721 = vmax.f32 %v660, 0.0
        %v722 = vmax.f32 %v663, 0.0
        %v723 = vmax.f32 %v668, 0.0
        %v724 = vmax.f32 %v671, 0.0
        %v725 = vmax.f32 %v676, 0.0
        %v726 = vpack.c.bf16 %v722, %v721
        %v727 = vpack.c.bf16 %v724, %v723
        %v728 = vpack.c.bf16 %v725, %v725
        %v729 = vld [vmem:[%s1] sm:$0xf]
        %v730 = vld [vmem:[%s1 + $0x4] sm:$0xf]
        %v731 = vld [vmem:[%s1 + $0x8] sm:$0xf]
        %v732 = vld [vmem:[%s1 + $0xc] sm:$0xf]
        %v737 = vunpack.c.l.b16 %v729
        %v738 = vunpack.c.l.b16 %v730
        %v739 = vunpack.c.l.b16 %v731
        %v740 = vunpack.c.l.b16 %v732
        %v741 = vpack.c.b16 %v738, %v737
        %v742 = vpack.c.b16 %v740, %v739
        %vm743 = vcmask 326656
        %v745 = vsel %vm743, %v741, 0
        %v748 = vsel %vm743, %v742, 0
        %vm750 = vcmask 1043456
        %v752 = vsel %vm750, %v728, 0
        %754 = vmatprep.subr.bf16.mxu0 0
        %755 = vmatpush1.bf16.msra.mxu0 0
        %756 = vmatprep.subr.bf16.mxu0 0
        %757 = vmatpush1.bf16.msra.mxu0 0
        %758 = vmatprep.subr.bf16.mxu0 0
        %759 = vmatpush1.bf16.msra.mxu0 0
        %760 = vmatprep.subr.bf16.mxu0 0
        %761 = vmatpush1.bf16.msra.mxu0 0
        %762 = vmatprep.subr.bf16.mxu0 0
        %763 = vmatpush1.bf16.msra.mxu0 0
        %764 = vmatprep.subr.bf16.mxu0 0
        %765 = vmatpush1.bf16.msra.mxu0 %v752
        %766 = vmatprep.subr.bf16.mxu0 0
        %767 = vmatpush1.bf16.msra.mxu0 %v727
        %768 = vmatprep.subr.bf16.mxu0 0
        %769 = vmatpush1.bf16.msra.mxu0 %v726
        %770 = vmatprep.subr.bf16.mxu0 0
        %771 = vmatpush2.bf16.msra.mxu0 0
        %772 = vmatprep.subr.bf16.mxu0 0
        %773 = vmatpush2.bf16.msra.mxu0 0
        %774 = vmatprep.subr.bf16.mxu0 0
        %775 = vmatpush2.bf16.msra.mxu0 0
        %776 = vmatprep.subr.bf16.mxu0 0
        %777 = vmatpush2.bf16.msra.mxu0 0
        %778 = vmatprep.subr.bf16.mxu0 0
        %779 = vmatpush2.bf16.msra.mxu0 0
        %780 = vmatprep.subr.bf16.mxu0 0
        %781 = vmatpush2.bf16.msra.mxu0 0
        %782 = vmatprep.subr.bf16.mxu0 0
        %783 = vmatpush2.bf16.msra.mxu0 0
        %784 = vmatprep.subr.bf16.mxu0 0
        %785 = vmatpush2.bf16.msra.mxu0 0
        %786 = vmatprep.mubr.bf16.mxu0 0
        %787 = vmatmul.mubr.bf16.gmra.mxu0 %v745
        %v788 = vpop.f32.mrf.mxu0
        %v789 = vadd.f32 0.0, %v788
        %v790 = vpop.f32.mrf.mxu0
        %v791 = vpop.f32.mrf.mxu0
        %v792 = vadd.f32 0.0, %v791
        %v793 = vpop.f32.mrf.mxu0
        %794 = vmatprep.mubr.bf16.mxu0 0
        %795 = vmatmul.mubr.bf16.gmra.mxu0 %v748
        %v796 = vpop.f32.mrf.mxu0
        %v797 = vadd.f32 0.0, %v796
        %v798 = vpop.f32.mrf.mxu0
        %v799 = vpop.f32.mrf.mxu0
        %v800 = vadd.f32 0.0, %v799
        %v801 = vpop.f32.mrf.mxu0
        %802 = vdwg.mxu0
        %v803 = vmax.f32 %v789, 0.0
        %v804 = vmax.f32 %v792, 0.0
        %v805 = vmax.f32 %v797, 0.0
        %v806 = vmax.f32 %v800, 0.0
        %v807 = vadd.f32 %v803, %v804
        %v808 = vadd.f32 %v807, %v805
        %v809 = vadd.f32 %v808, %v806
        %v810 = vrot.slane %v809, 4
        %v811 = vadd.f32 %v809, %v810
        %v812 = vrot.slane %v811, 2
        %v813 = vadd.f32 %v811, %v812
        %v814 = vrot.slane %v813, 1
        %v815 = vadd.f32 %v813, %v814
        %v816 = vadd.f32 %v720, %v714
        %v817 = vadd.f32 %v816, %v815
        %818 = vst [vmem:[%s286] sm:$0x1] %v817
        %s819 = sand.u32 %s179, 1
        %s820 = scalar_lea.sflag [#allocation13], %s819
        %s821 = sand.u32 %s179, 1
        %s822 = scalar_lea.vmem [#allocation12], %s821
        // Predicated region
        $region45: #{deepfm_forward.2} parent=43 // pred_check
          %p823 = pneg %p189
        $region46: #{deepfm_forward.2} parent=43 // pred_check_branch
          %825 = sbr.rel (%p823) target = $region48
        $region47: #{deepfm_forward.2} parent=43 // pred_region
          %s827 = ssub.s32 16, 16
          %828 = vsyncadd %s820, %s827
          %s829 = smul.addr %s31, 16
          %s830 = scalar_lea.hbm %s7, %s829
          %s832 = sshll.u32 %s822, 4
          %s833 = int_to_ptr.vmem [resolvable:$true] %s832
          %835 = dma.vmem_to_hbm [thread:$0]  %s833, 16, %s830, %s820
        $region48: #{deepfm_forward.2} parent=43 // pred_fallthru
          _
      $region44: #{deepfm_forward.2} parent=5 // pred_fallthru
        _
      %p836 = scmp.le.s32.totalorder 2, %s26
      // Predicated region
      $region49: #{deepfm_forward.2} parent=5 // pred_check
        %p837 = pneg %p836
      $region50: #{deepfm_forward.2} parent=5 // pred_check_branch
        %839 = sbr.rel (%p837) target = $region52
      $region51: #{deepfm_forward.2} parent=5 // pred_region
        %s840 = ssub.s32 %s26, 2
        // Predicated region
        $region53: #{deepfm_forward.2} parent=51 // pred_check
          %p841 = pneg %p195
        $region54: #{deepfm_forward.2} parent=51 // pred_check_branch
          %843 = sbr.rel (%p841) target = $region56
        $region55: #{deepfm_forward.2} parent=51 // pred_region
          %s844 = sand.u32 %s180, 1
          %s845 = scalar_lea.sflag [#allocation13], %s844
          %s846 = sand.u32 %s180, 1
          %s847 = scalar_lea.vmem [#allocation12], %s846
          %848 = dma.done %s845, 16
        $region56: #{deepfm_forward.2} parent=51 // pred_fallthru
          _
      $region52: #{deepfm_forward.2} parent=5 // pred_fallthru
        _
    $region6: #{deepfm_forward.2} parent=1 // loop_footer
      %s30 = sadd.s32 1, %s26
    $region7: #{deepfm_forward.2} parent=1 // loop_footer_branch
      %25 = sbr.rel target = $region3
    $region8: #{deepfm_forward.2} parent=1 // loop_exit
      _
    %849 = vsyncpa [#allocation13], 1
    %s850 = scalar_lea.sflag [#allocation13], 1
    %851 = vsyncpa %s850, 1

</llo_original>
